<compile_context>
chip_gen: v6e
topology: v6e:2x2x1
jax: 0.10.0
libtpu: 0.0.40
codegen_flags: <defaults>
</compile_context>

<pallas_src>
import functools

import jax
import jax.numpy as jnp
from jax import lax
from jax.experimental import pallas as pl
from jax.experimental.pallas import tpu as pltpu

N_EMBD = 384
BLOCK_SIZE = 256   # causal mask buffer size in the reference (T must be <= this)
DROPOUT_P = 0.2    # unused (eval-mode)


def _head_kernel(x_ref, wqkv_ref, o_ref, k_s, q_s, v_s, *, head_size, q_chunk):
    # x_ref:    (Bb, T, C)   bf16 VMEM tile (Bb batch elements)
    # wqkv_ref: (C, 3H)      bf16 packed [W_key | W_query*scale | W_value]
    # o_ref:    (1, T, Bb*H) lane-dense output slab (f32)
    # k_s/q_s/v_s: (Bb, T, H) bf16 VMEM scratch
    H = head_size
    Bb, T, C = x_ref.shape

    # ---- Fused QKV projection over all Bb*T rows (bf16 operands, f32 accumulate) ----
    x2 = x_ref[...].reshape(Bb * T, C)                               # bf16
    w = wqkv_ref[...]                                                # (C, 3H) bf16
    qkv = jnp.dot(x2, w, preferred_element_type=jnp.float32)         # (Bb*T, 3H) f32
    qkv = qkv.reshape(Bb, T, 3 * H)

    # Slice the 192-lane slab ONCE into lane-aligned bf16 scratch buffers; all
    # later per-batch / per-chunk reads are clean aligned loads.
    k_s[...] = qkv[:, :, 0:H].astype(jnp.bfloat16)
    q_s[...] = qkv[:, :, H:2 * H].astype(jnp.bfloat16)               # scale already folded in
    v_s[...] = qkv[:, :, 2 * H:3 * H].astype(jnp.bfloat16)

    # ---- Attention: query-row tiling + causal key-block skipping ----
    for q0 in range(0, T, q_chunk):                                  # static loop
        cq = min(q_chunk, T - q0)
        kv_len = q0 + cq                                             # keys beyond are fully masked
        # Mask depends only on (q0, cq, kv_len): build once, reuse for all Bb batches.
        row = lax.broadcasted_iota(jnp.int32, (cq, kv_len), 0) + q0
        col = lax.broadcasted_iota(jnp.int32, (cq, kv_len), 1)
        causal = col <= row

        for b in range(Bb):                                          # static loop
            qs = q_s[b, q0:q0 + cq, :]                               # (cq, H)     bf16
            kb = k_s[b, 0:kv_len, :]                                 # (kv_len, H) bf16
            vb = v_s[b, 0:kv_len, :]                                 # (kv_len, H) bf16

            # scores: contract q dim 1 with k dim 1 -> (cq, kv_len); no explicit transpose.
            s = lax.dot_general(qs, kb, (((1,), (1,)), ((), ())),
                                preferred_element_type=jnp.float32)
            s = jnp.where(causal, s, -jnp.inf)

            # numerically stable softmax; divide -> EUP reciprocal + multiply
            m = jnp.max(s, axis=-1, keepdims=True)
            p = jnp.exp(s - m)
            denom = jnp.sum(p, axis=-1, keepdims=True)
            p = p * pl.reciprocal(denom, approx=True)

            out_chunk = jnp.dot(p.astype(jnp.bfloat16), vb,
                                preferred_element_type=jnp.float32)  # (cq, H)
            # Direct store into the lane-dense output slab; static indices.
            o_ref[0, q0:q0 + cq, b * H:(b + 1) * H] = out_chunk.astype(o_ref.dtype)


def _pick_batch_block(B):
    # Largest divisor of B that is <= 8; prefer candidates giving an even grid
    # length >= 2 so v7x megacore can split the grid across both TensorCores
    # (nearly free on single-TC v5e/v6e: per-step overhead ~0.35us).
    cands = [c for c in range(1, min(B, 8) + 1) if B % c == 0]
    even_grid = [c for c in cands if (B // c) >= 2 and (B // c) % 2 == 0]
    pool = even_grid if even_grid else cands
    return max(pool)


def head_forward(x, w_key, w_query, w_value, *, batch_block=None):
    """x: (B, T, C) float32; w_*: (C, H) float32 (transposed vs nn.Linear.weight)."""
    B, T, C = x.shape
    H = w_key.shape[1]
    assert C == N_EMBD and T <= BLOCK_SIZE
    scale = H ** (-0.5)

    bb = _pick_batch_block(B) if batch_block is None else batch_block
    assert B % bb == 0
    grid = (B // bb,)
    q_chunk = min(T, 128)

    # Pack QKV weights once in the wrapper: (C, 3H), order [key | query*scale | value].
    # Scale folded into the query weight (one-time constant-foldable op).
    w_qkv = jnp.concatenate([w_key, w_query * scale, w_value], axis=1).astype(jnp.bfloat16)
    x_bf = x.astype(jnp.bfloat16)

    # Cost estimate (accounts for causal key-block skipping and bf16 I/O).
    attn_pairs = 0
    for q0 in range(0, T, q_chunk):
        cq = min(q_chunk, T - q0)
        attn_pairs += cq * (q0 + cq)
    flops = 2 * B * T * C * (3 * H) + 4 * B * attn_pairs * H
    transcendentals = B * attn_pairs
    bytes_accessed = x_bf.size * 2 + w_qkv.size * 2 + B * T * H * 4

    kernel = functools.partial(_head_kernel, head_size=H, q_chunk=q_chunk)

    out_packed = pl.pallas_call(
        kernel,
        out_shape=jax.ShapeDtypeStruct((B // bb, T, bb * H), x.dtype),
        grid_spec=pltpu.PrefetchScalarGridSpec(
            num_scalar_prefetch=0,
            grid=grid,
            in_specs=[
                pl.BlockSpec((bb, T, C), lambda g: (g, 0, 0)),     # x batch block (bf16)
                pl.BlockSpec((C, 3 * H), lambda g: (0, 0)),        # packed W_qkv (bf16)
            ],
            out_specs=pl.BlockSpec((1, T, bb * H), lambda g: (g, 0, 0)),
            scratch_shapes=[
                pltpu.VMEM((bb, T, H), jnp.bfloat16),              # k scratch
                pltpu.VMEM((bb, T, H), jnp.bfloat16),              # q scratch
                pltpu.VMEM((bb, T, H), jnp.bfloat16),              # v scratch
            ],
        ),
        compiler_params=pltpu.CompilerParams(
            dimension_semantics=("parallel",),
            vmem_limit_bytes=32 * 1024 * 1024,
        ),
        cost_estimate=pl.CostEstimate(flops=flops,
                                      transcendentals=transcendentals,
                                      bytes_accessed=bytes_accessed),
    )(x_bf, w_qkv)

    # Unpack the lane-dense slab: (B//bb, T, bb*H) -> (B, T, H). Pure layout plumbing.
    out = out_packed.reshape(B // bb, T, bb, H)
    out = jnp.transpose(out, (0, 2, 1, 3)).reshape(B, T, H)
    return out


def reference_forward(x, w_key, w_query, w_value):
    """Pure-JAX f32 reference matching the PyTorch forward (eval mode)."""
    H = w_key.shape[1]
    k = x @ w_key
    q = x @ w_query
    v = x @ w_value
    wei = jnp.einsum("btd,bsd->bts", q, k) * (H ** (-0.5))
    T = x.shape[1]
    tril = jnp.tril(jnp.ones((T, T), dtype=bool))
    wei = jnp.where(tril, wei, -jnp.inf)
    wei = jax.nn.softmax(wei, axis=-1)
    return wei @ v


if __name__ == "__main__":
    key = jax.random.PRNGKey(0)
    B, T, C = 2, 8, N_EMBD
    head_size = 64

    kx, kk, kq, kv = jax.random.split(key, 4)
    x = jax.random.normal(kx, (B, T, C), dtype=jnp.float32)

    # nn.Linear init: normal(mean=0, std=0.01); stored transposed (C, H)
    w_key = 0.01 * jax.random.normal(kk, (C, head_size), dtype=jnp.float32)
    w_query = 0.01 * jax.random.normal(kq, (C, head_size), dtype=jnp.float32)
    w_value = 0.01 * jax.random.normal(kv, (C, head_size), dtype=jnp.float32)

    out = head_forward(x, w_key, w_query, w_value)
    out = jax.block_until_ready(out)

    ref = reference_forward(x, w_key, w_query, w_value)
    assert out.shape == (B, T, head_size)
    # bf16 inputs + bf16 matmul operands + approximate softmax reciprocal:
    # compare at bf16-level tolerance (rows may not sum to exactly 1, ~1e-3 rel).
    assert jnp.allclose(out, ref, atol=1e-2, rtol=2e-2), "mismatch vs reference"

    print("KERNEL_OK")
</pallas_src>

<mosaic_0001>
module attributes {stable_mosaic.version = 11 : i64} {
  func.func @_head_kernel(%arg0: i32, %arg1: memref<1x8x384xbf16, #tpu.memory_space<vmem>>, %arg2: memref<384x192xbf16, #tpu.memory_space<vmem>>, %arg3: memref<1x8x64xf32, #tpu.memory_space<vmem>>, %arg4: memref<1x8x64xbf16, #tpu.memory_space<vmem>>, %arg5: memref<1x8x64xbf16, #tpu.memory_space<vmem>>, %arg6: memref<1x8x64xbf16, #tpu.memory_space<vmem>>) attributes {dimension_semantics = [#tpu.dimension_semantics<parallel>], iteration_bounds = array<i64: 2>, scalar_prefetch = 0 : i64, scratch_operands = 3 : i64, tpu.core_type = #tpu.core_type<tc>, window_params = [{transform_indices = @transform_0, window_bounds = array<i64: 1, 8, 384>}, {pipeline_mode = #tpu.pipeline_mode<synchronous>, transform_indices = @transform_1, window_bounds = array<i64: 384, 192>}, {transform_indices = @transform_2, window_bounds = array<i64: 1, 8, 64>}]} {
    %c0 = arith.constant 0 : index
    %c0_0 = arith.constant 0 : index
    %c0_1 = arith.constant 0 : index
    %0 = vector.load %arg1[%c0, %c0_0, %c0_1] : memref<1x8x384xbf16, #tpu.memory_space<vmem>>, vector<1x8x384xbf16>
    %1 = vector.shape_cast %0 : vector<1x8x384xbf16> to vector<8x384xbf16>
    %c0_2 = arith.constant 0 : index
    %c0_3 = arith.constant 0 : index
    %2 = vector.load %arg2[%c0_2, %c0_3] : memref<384x192xbf16, #tpu.memory_space<vmem>>, vector<384x192xbf16>
    %cst = arith.constant dense<0.000000e+00> : vector<8x192xf32>
    %3 = tpu.matmul %1, %2, %cst {dimension_numbers = #tpu.dot_dimension_numbers<[1], [0], [0], [1], [0, 0, 1, 1], [], []>} : vector<8x384xbf16>, vector<384x192xbf16>, vector<8x192xf32> -> vector<8x192xf32>
    %4 = vector.shape_cast %3 : vector<8x192xf32> to vector<1x8x192xf32>
    %5 = vector.extract_strided_slice %4 {offsets = [0, 0, 0], sizes = [1, 8, 64], strides = [1, 1, 1]} : vector<1x8x192xf32> to vector<1x8x64xf32>
    %6 = arith.truncf %5 : vector<1x8x64xf32> to vector<1x8x64xbf16>
    %c0_4 = arith.constant 0 : index
    %c0_5 = arith.constant 0 : index
    %c0_6 = arith.constant 0 : index
    %7 = vector.load %arg4[%c0_4, %c0_5, %c0_6] : memref<1x8x64xbf16, #tpu.memory_space<vmem>>, vector<1x8x64xbf16>
    tpu.vector_store %arg4[%c0_4, %c0_5, %c0_6], %6 {strides = array<i32>} : memref<1x8x64xbf16, #tpu.memory_space<vmem>>, vector<1x8x64xbf16>,
    %8 = vector.extract_strided_slice %4 {offsets = [0, 0, 64], sizes = [1, 8, 64], strides = [1, 1, 1]} : vector<1x8x192xf32> to vector<1x8x64xf32>
    %9 = arith.truncf %8 : vector<1x8x64xf32> to vector<1x8x64xbf16>
    %c0_7 = arith.constant 0 : index
    %c0_8 = arith.constant 0 : index
    %c0_9 = arith.constant 0 : index
    %10 = vector.load %arg5[%c0_7, %c0_8, %c0_9] : memref<1x8x64xbf16, #tpu.memory_space<vmem>>, vector<1x8x64xbf16>
    tpu.vector_store %arg5[%c0_7, %c0_8, %c0_9], %9 {strides = array<i32>} : memref<1x8x64xbf16, #tpu.memory_space<vmem>>, vector<1x8x64xbf16>,
    %11 = vector.extract_strided_slice %4 {offsets = [0, 0, 128], sizes = [1, 8, 64], strides = [1, 1, 1]} : vector<1x8x192xf32> to vector<1x8x64xf32>
    %12 = arith.truncf %11 : vector<1x8x64xf32> to vector<1x8x64xbf16>
    %c0_10 = arith.constant 0 : index
    %c0_11 = arith.constant 0 : index
    %c0_12 = arith.constant 0 : index
    %13 = vector.load %arg6[%c0_10, %c0_11, %c0_12] : memref<1x8x64xbf16, #tpu.memory_space<vmem>>, vector<1x8x64xbf16>
    tpu.vector_store %arg6[%c0_10, %c0_11, %c0_12], %12 {strides = array<i32>} : memref<1x8x64xbf16, #tpu.memory_space<vmem>>, vector<1x8x64xbf16>,
    %14 = tpu.iota {dimensions = array<i32: 0>} : vector<8x8xi32>
    %c0_i32 = arith.constant 0 : i32
    %15 = vector.broadcast %c0_i32 : i32 to vector<8x8xi32>
    %16 = arith.addi %14, %15 : vector<8x8xi32>
    %17 = tpu.iota {dimensions = array<i32: 1>} : vector<8x8xi32>
    %18 = arith.cmpi sle, %17, %16 : vector<8x8xi32>
    %c0_13 = arith.constant 0 : index
    %c0_14 = arith.constant 0 : index
    %c0_15 = arith.constant 0 : index
    %19 = vector.load %arg5[%c0_13, %c0_14, %c0_15] : memref<1x8x64xbf16, #tpu.memory_space<vmem>>, vector<1x8x64xbf16>
    %20 = vector.shape_cast %19 : vector<1x8x64xbf16> to vector<8x64xbf16>
    %c0_16 = arith.constant 0 : index
    %c0_17 = arith.constant 0 : index
    %c0_18 = arith.constant 0 : index
    %21 = vector.load %arg4[%c0_16, %c0_17, %c0_18] : memref<1x8x64xbf16, #tpu.memory_space<vmem>>, vector<1x8x64xbf16>
    %22 = vector.shape_cast %21 : vector<1x8x64xbf16> to vector<8x64xbf16>
    %c0_19 = arith.constant 0 : index
    %c0_20 = arith.constant 0 : index
    %c0_21 = arith.constant 0 : index
    %23 = vector.load %arg6[%c0_19, %c0_20, %c0_21] : memref<1x8x64xbf16, #tpu.memory_space<vmem>>, vector<1x8x64xbf16>
    %24 = vector.shape_cast %23 : vector<1x8x64xbf16> to vector<8x64xbf16>
    %cst_22 = arith.constant dense<0.000000e+00> : vector<8x8xf32>
    %25 = tpu.matmul %20, %22, %cst_22 {dimension_numbers = #tpu.dot_dimension_numbers<[1], [1], [0], [0], [0, 0, 1, 0], [], []>} : vector<8x64xbf16>, vector<8x64xbf16>, vector<8x8xf32> -> vector<8x8xf32>
    %cst_23 = arith.constant 0xFF800000 : f32
    %26 = vector.broadcast %cst_23 : f32 to vector<8x8xf32>
    %27 = arith.select %18, %25, %26 : vector<8x8xi1>, vector<8x8xf32>
    %cst_24 = arith.constant dense<0xFF800000> : vector<8xf32>
    %28 = vector.multi_reduction <maximumf>, %27, %cst_24 [1] : vector<8x8xf32> to vector<8xf32>
    %29 = vector.shape_cast %28 : vector<8xf32> to vector<8x1xf32>
    %30 = vector.broadcast %29 : vector<8x1xf32> to vector<8x8xf32>
    %31 = arith.subf %27, %30 : vector<8x8xf32>
    %32 = math.exp %31 : vector<8x8xf32>
    %cst_25 = arith.constant dense<0.000000e+00> : vector<8xf32>
    %33 = vector.multi_reduction <add>, %32, %cst_25 [1] : vector<8x8xf32> to vector<8xf32>
    %34 = vector.shape_cast %33 : vector<8xf32> to vector<8x1xf32>
    %35 = tpu.reciprocal %34 {approx = true} : vector<8x1xf32> -> vector<8x1xf32>
    %36 = vector.broadcast %35 : vector<8x1xf32> to vector<8x8xf32>
    %37 = arith.mulf %32, %36 : vector<8x8xf32>
    %38 = arith.truncf %37 : vector<8x8xf32> to vector<8x8xbf16>
    %cst_26 = arith.constant dense<0.000000e+00> : vector<8x64xf32>
    %39 = tpu.matmul %38, %24, %cst_26 {dimension_numbers = #tpu.dot_dimension_numbers<[1], [0], [0], [1], [0, 0, 1, 1], [], []>} : vector<8x8xbf16>, vector<8x64xbf16>, vector<8x64xf32> -> vector<8x64xf32>
    %c0_27 = arith.constant 0 : index
    %c0_28 = arith.constant 0 : index
    %c0_29 = arith.constant 0 : index
    %40 = vector.load %arg3[%c0_27, %c0_28, %c0_29] : memref<1x8x64xf32, #tpu.memory_space<vmem>>, vector<1x8x64xf32>
    %41 = vector.shape_cast %40 : vector<1x8x64xf32> to vector<8x64xf32>
    %42 = vector.shape_cast %39 : vector<8x64xf32> to vector<1x8x64xf32>
    tpu.vector_store %arg3[%c0_27, %c0_28, %c0_29], %42 {strides = array<i32>} : memref<1x8x64xf32, #tpu.memory_space<vmem>>, vector<1x8x64xf32>,
    return
  }
  func.func @transform_0(%arg0: i32) -> (i32, i32, i32) {
    %c0_i32 = arith.constant 0 : i32
    %c0_i32_0 = arith.constant 0 : i32
    %c0_i32_1 = arith.constant 0 : i32
    return %arg0, %c0_i32, %c0_i32_0 : i32, i32, i32
  }
  func.func @transform_1(%arg0: i32) -> (i32, i32) {
    %c0_i32 = arith.constant 0 : i32
    %c0_i32_0 = arith.constant 0 : i32
    %c0_i32_1 = arith.constant 0 : i32
    return %c0_i32, %c0_i32_0 : i32, i32
  }
  func.func @transform_2(%arg0: i32) -> (i32, i32, i32) {
    %c0_i32 = arith.constant 0 : i32
    %c0_i32_0 = arith.constant 0 : i32
    %c0_i32_1 = arith.constant 0 : i32
    return %arg0, %c0_i32, %c0_i32_0 : i32, i32, i32
  }
}

</mosaic_0001>

<llo_original>
// kernel: tpu_custom_call.1
$region0: #{tpu_custom_call.1}
  #allocation0 [shape = 'u32[]', space=smem, size = 0x4, offset = 0x4, fixed_abs, tag = 'smem constant byte address 0x4 - core index']
  #allocation1 [shape = 'u32[144,128]{1,0:T(1,128)}', space=vmem, size = 0x12000, scoped, tag = 'internal scratch']
  #allocation2 [shape = 'bf16[1,8,64]{2,1,0:T(8,128)(2,1)}', space=vmem, size = 0x800, scoped, tag = 'scratch operand']
  #allocation3 [shape = 'bf16[1,8,64]{2,1,0:T(8,128)(2,1)}', space=vmem, size = 0x800, scoped, tag = 'scratch operand']
  #allocation4 [shape = 'bf16[1,8,64]{2,1,0:T(8,128)(2,1)}', space=vmem, size = 0x800, scoped, tag = 'scratch operand']
  %s0 = inlined_call_operand.vmem [shape: bf16[2,8,384], index: 0, kind: input, shape index: {}]
  %s1 = inlined_call_operand.vmem [shape: bf16[384,192], index: 1, kind: input, shape index: {}]
  %s2 = inlined_call_operand.hbm [shape: f32[2,8,64], index: 2, kind: output, shape index: {}]
  %s3 = sld [smem:[#allocation0]]
  $region41: #{tpu_custom_call.1} parent=0
    _
  %s5 = ssub.s32 1, %s3
  %s6 = scalar_select 0, %s5, %s3
  $region1: #{tpu_custom_call.1} parent=0
    #allocation5 [shape = 'u8[8192]{0}', space=vmem, size = 0x2000, scoped, tag = 'output window, operand 0']
    #allocation6 [shape = 's32[2]{0}', space=sflag, size = 0x8, scoped, tag = 'scoped memory for tpu_custom_call.1']
    %7 = vsyncpa [#allocation6], 0
    %s8 = scalar_lea.sflag [#allocation6], 1
    %9 = vsyncpa %s8, 0
    loop: start=0, step=1, limit=4
    $region2: #{tpu_custom_call.1} parent=1 // loop_pre_header
      _
    $region3: #{tpu_custom_call.1} parent=1 // loop_header
      %s11 = sphi 0, %s15
      %p12 = scmp.ge.s32.totalorder %s11, 4
      %s21 = sphi 0, %s23
      %s24 = sphi 0, %s21
      %s25 = sphi 0, %s24
      %s41 = sphi 0, %s25
      %s45 = sphi 0, %s45
      %s47 = sphi 0, %s45
      %s48 = sphi 0, %s47
      %s62 = sphi 0, %s48
      %s68 = sphi 0, %s70
      %s71 = sphi 0, %s68
      %s72 = sphi 0, %s71
      %s88 = sphi 0, %s72
    $region4: #{tpu_custom_call.1} parent=1 // loop_header_branch
      %14 = sbr.rel (%p12) target = $region8
    $region5: #{tpu_custom_call.1} parent=1 // loop_body
      %s16 = ssub.s32 %s11, 1
      %s17 = ssub.s32 %s11, 2
      %s18 = sadd.s32 %s11, 1
      %s19 = ssub.s32 %s11, %s18
      %p20 = scmp.eq.s32.totalorder %s19, 0
      %s22 = sadd.s32 %s21, 1
      %s23 = scalar_select %p20, %s21, %s22
      %p26 = pneg %p20
      %p27 = scmp.eq.s32.totalorder %s11, 1
      %p28 = por %p26, %p27
      %p29 = scmp.ne.s32.totalorder %s21, %s24
      %p30 = scmp.eq.s32.totalorder %s11, 0
      %p31 = por %p29, %p30
      %p32 = scmp.ne.s32.totalorder %s21, %s24
      %p33 = scmp.eq.s32.totalorder %s16, 1
      %p34 = por %p32, %p33
      %p35 = scmp.ne.s32.totalorder %s24, %s25
      %p36 = scmp.eq.s32.totalorder %s16, 0
      %p37 = por %p35, %p36
      %p38 = scmp.ne.s32.totalorder %s24, %s25
      %p39 = scmp.eq.s32.totalorder %s17, 1
      %p40 = por %p38, %p39
      %p42 = scmp.ne.s32.totalorder %s25, %s41
      %p43 = scmp.eq.s32.totalorder %s17, 0
      %p44 = por %p42, %p43
      %s46 = sadd.s32 %s45, 1
      %p49 = scmp.eq.s32.totalorder %s11, 1
      %p50 = scmp.ne.s32.totalorder %s45, %s47
      %p51 = scmp.eq.s32.totalorder %s11, 0
      %p52 = por %p50, %p51
      %p53 = scmp.ne.s32.totalorder %s45, %s47
      %p54 = scmp.eq.s32.totalorder %s16, 1
      %p55 = por %p53, %p54
      %p56 = scmp.ne.s32.totalorder %s47, %s48
      %p57 = scmp.eq.s32.totalorder %s16, 0
      %p58 = por %p56, %p57
      %p59 = scmp.ne.s32.totalorder %s47, %s48
      %p60 = scmp.eq.s32.totalorder %s17, 1
      %p61 = por %p59, %p60
      %p63 = scmp.ne.s32.totalorder %s48, %s62
      %p64 = scmp.eq.s32.totalorder %s17, 0
      %p65 = por %p63, %p64
      %s66 = ssub.s32 %s11, %s18
      %p67 = scmp.eq.s32.totalorder %s66, 0
      %s69 = sadd.s32 %s68, 1
      %s70 = scalar_select %p67, %s68, %s69
      %p73 = pneg %p67
      %p74 = scmp.eq.s32.totalorder %s11, 1
      %p75 = por %p73, %p74
      %p76 = scmp.ne.s32.totalorder %s68, %s71
      %p77 = scmp.eq.s32.totalorder %s11, 0
      %p78 = por %p76, %p77
      %p79 = scmp.ne.s32.totalorder %s68, %s71
      %p80 = scmp.eq.s32.totalorder %s16, 1
      %p81 = por %p79, %p80
      %p82 = scmp.ne.s32.totalorder %s71, %s72
      %p83 = scmp.eq.s32.totalorder %s16, 0
      %p84 = por %p82, %p83
      %p85 = scmp.ne.s32.totalorder %s71, %s72
      %p86 = scmp.eq.s32.totalorder %s17, 1
      %p87 = por %p85, %p86
      %p89 = scmp.ne.s32.totalorder %s72, %s88
      %p90 = scmp.eq.s32.totalorder %s17, 0
      %p91 = por %p89, %p90
      %p92 = scmp.le.s32.totalorder 1, %s11
      %p93 = scmp.lt.s32.totalorder %s11, 3
      %p94 = pnand %p92, %p93
      %p95 = pneg %p94
      // Predicated region
      $region9: #{tpu_custom_call.1} parent=5 // pred_check
        _
      $region10: #{tpu_custom_call.1} parent=5 // pred_check_branch
        %97 = sbr.rel (%p94) target = $region12
      $region11: #{tpu_custom_call.1} parent=5 // pred_region
        %s98 = ssub.s32 %s11, 1
        // Predicated region
        $region13: #{tpu_custom_call.1} parent=11 // pred_check
          %p99 = pneg %p58
        $region14: #{tpu_custom_call.1} parent=11 // pred_check_branch
          %101 = sbr.rel (%p99) target = $region16
        $region15: #{tpu_custom_call.1} parent=11 // pred_region
          _
        $region16: #{tpu_custom_call.1} parent=11 // pred_fallthru
          _
      $region12: #{tpu_custom_call.1} parent=5 // pred_fallthru
        _
      %p102 = scmp.lt.s32.totalorder %s11, 2
      // Predicated region
      $region17: #{tpu_custom_call.1} parent=5 // pred_check
        %p103 = pneg %p102
      $region18: #{tpu_custom_call.1} parent=5 // pred_check_branch
        %105 = sbr.rel (%p103) target = $region20
      $region19: #{tpu_custom_call.1} parent=5 // pred_region
        // Predicated region
        $region21: #{tpu_custom_call.1} parent=19 // pred_check
          %p106 = pneg %p31
        $region22: #{tpu_custom_call.1} parent=19 // pred_check_branch
          %108 = sbr.rel (%p106) target = $region24
        $region23: #{tpu_custom_call.1} parent=19 // pred_region
          %p109 = scmp.lt.s32.totalorder %s11, 1
          %s110 = scalar_select %p109, %s11, 1
          %s111 = smul.addr %s110, 3
          %s112 = smul.addr %s111, 4
          %s113 = scalar_lea.vmem %s0, %s112
        $region24: #{tpu_custom_call.1} parent=19 // pred_fallthru
          _
      $region20: #{tpu_custom_call.1} parent=5 // pred_fallthru
        _
      %p114 = scmp.le.s32.totalorder 1, %s11
      %p115 = scmp.lt.s32.totalorder %s11, 3
      %p116 = pnand %p114, %p115
      %p117 = pneg %p116
      // Predicated region
      $region25: #{tpu_custom_call.1} parent=5 // pred_check
        _
      $region26: #{tpu_custom_call.1} parent=5 // pred_check_branch
        %119 = sbr.rel (%p116) target = $region28
      $region27: #{tpu_custom_call.1} parent=5 // pred_region
        %s120 = ssub.s32 %s11, 1
        %p121 = scmp.lt.s32.totalorder %s16, 1
        %s122 = scalar_select %p121, %s16, 1
        %s123 = smul.addr %s122, 3
        %s124 = smul.addr %s123, 4
        %s125 = scalar_lea.vmem %s0, %s124
        %p126 = pneg %p37
        %p127 = pneg %p34
        %p128 = pneg %p58
        %p129 = pneg %p55
        %p130 = pneg %p84
        %p131 = pneg %p81
        %s132 = sand.u32 %s71, 1
        %s133 = scalar_lea.sflag [#allocation6], %s132
        %s134 = sand.u32 %s71, 1
        %s135 = smul.addr %s134, 8
        %s136 = scalar_lea.vmem [#allocation5], %s135
        %p137 = scmp.lt.s32.totalorder %s16, 1
        %s138 = scalar_select %p137, %s16, 1
        %s139 = smul.addr %s138, 3
        %s140 = smul.addr %s139, 4
        %s141 = scalar_lea.vmem %s0, %s140
        %v143 = vld [vmem:[%s141] sm:$0xff]
        %v144 = vld [vmem:[%s141 + $0x8] sm:$0xf]
        %v145 = vld [vmem:[%s1] sm:$0xff]
        %v146 = vld [vmem:[%s1 + $0x8] sm:$0xff]
        %v147 = vld [vmem:[%s1 + $0x10] sm:$0xff]
        %v148 = vld [vmem:[%s1 + $0x18] sm:$0xff]
        %v149 = vld [vmem:[%s1 + $0x20] sm:$0xff]
        %v150 = vld [vmem:[%s1 + $0x28] sm:$0xff]
        %v151 = vld [vmem:[%s1 + $0x30] sm:$0xff]
        %v152 = vld [vmem:[%s1 + $0x38] sm:$0xff]
        %v153 = vld [vmem:[%s1 + $0x40] sm:$0xff]
        %v154 = vld [vmem:[%s1 + $0x48] sm:$0xff]
        %v155 = vld [vmem:[%s1 + $0x50] sm:$0xff]
        %v156 = vld [vmem:[%s1 + $0x58] sm:$0xff]
        %v157 = vld [vmem:[%s1 + $0x60] sm:$0xff]
        %v158 = vld [vmem:[%s1 + $0x68] sm:$0xff]
        %v159 = vld [vmem:[%s1 + $0x70] sm:$0xff]
        %v160 = vld [vmem:[%s1 + $0x78] sm:$0xff]
        %v161 = vld [vmem:[%s1 + $0x80] sm:$0xff]
        %v162 = vld [vmem:[%s1 + $0x88] sm:$0xff]
        %v163 = vld [vmem:[%s1 + $0x90] sm:$0xff]
        %v164 = vld [vmem:[%s1 + $0x98] sm:$0xff]
        %v165 = vld [vmem:[%s1 + $0xa0] sm:$0xff]
        %v166 = vld [vmem:[%s1 + $0xa8] sm:$0xff]
        %v167 = vld [vmem:[%s1 + $0xb0] sm:$0xff]
        %v168 = vld [vmem:[%s1 + $0xb8] sm:$0xff]
        %v169 = vld [vmem:[%s1 + $0xc0] sm:$0xff]
        %v170 = vld [vmem:[%s1 + $0xc8] sm:$0xff]
        %v171 = vld [vmem:[%s1 + $0xd0] sm:$0xff]
        %v172 = vld [vmem:[%s1 + $0xd8] sm:$0xff]
        %v173 = vld [vmem:[%s1 + $0xe0] sm:$0xff]
        %v174 = vld [vmem:[%s1 + $0xe8] sm:$0xff]
        %v175 = vld [vmem:[%s1 + $0xf0] sm:$0xff]
        %v176 = vld [vmem:[%s1 + $0xf8] sm:$0xff]
        %v177 = vld [vmem:[%s1 + $0x100] sm:$0xff]
        %v178 = vld [vmem:[%s1 + $0x108] sm:$0xff]
        %v179 = vld [vmem:[%s1 + $0x110] sm:$0xff]
        %v180 = vld [vmem:[%s1 + $0x118] sm:$0xff]
        %v181 = vld [vmem:[%s1 + $0x120] sm:$0xff]
        %v182 = vld [vmem:[%s1 + $0x128] sm:$0xff]
        %v183 = vld [vmem:[%s1 + $0x130] sm:$0xff]
        %v184 = vld [vmem:[%s1 + $0x138] sm:$0xff]
        %v185 = vld [vmem:[%s1 + $0x140] sm:$0xff]
        %v186 = vld [vmem:[%s1 + $0x148] sm:$0xff]
        %v187 = vld [vmem:[%s1 + $0x150] sm:$0xff]
        %v188 = vld [vmem:[%s1 + $0x158] sm:$0xff]
        %v189 = vld [vmem:[%s1 + $0x160] sm:$0xff]
        %v190 = vld [vmem:[%s1 + $0x168] sm:$0xff]
        %v191 = vld [vmem:[%s1 + $0x170] sm:$0xff]
        %v192 = vld [vmem:[%s1 + $0x178] sm:$0xff]
        %v195 = vunpack.c.l.b16 %v143
        %v196 = vunpack.c.h.b16 %v143
        %v197 = vunpack.c.l.b16 %v144
        %v198 = vpack.c.b16 %v195, %v195
        %v199 = vpack.c.b16 %v196, %v196
        %v200 = vpack.c.b16 %v197, %v197
        %v252 = vunpack.c.l.b16 %v145
        %v253 = vunpack.c.h.b16 %v145
        %v254 = vunpack.c.l.b16 %v146
        %v255 = vunpack.c.h.b16 %v146
        %v256 = vunpack.c.l.b16 %v147
        %v257 = vunpack.c.h.b16 %v147
        %v258 = vunpack.c.l.b16 %v148
        %v259 = vunpack.c.h.b16 %v148
        %v260 = vunpack.c.l.b16 %v149
        %v261 = vunpack.c.h.b16 %v149
        %v262 = vunpack.c.l.b16 %v150
        %v263 = vunpack.c.h.b16 %v150
        %v264 = vunpack.c.l.b16 %v151
        %v265 = vunpack.c.h.b16 %v151
        %v266 = vunpack.c.l.b16 %v152
        %v267 = vunpack.c.h.b16 %v152
        %v268 = vunpack.c.l.b16 %v153
        %v269 = vunpack.c.h.b16 %v153
        %v270 = vunpack.c.l.b16 %v154
        %v271 = vunpack.c.h.b16 %v154
        %v272 = vunpack.c.l.b16 %v155
        %v273 = vunpack.c.h.b16 %v155
        %v274 = vunpack.c.l.b16 %v156
        %v275 = vunpack.c.h.b16 %v156
        %v276 = vunpack.c.l.b16 %v157
        %v277 = vunpack.c.h.b16 %v157
        %v278 = vunpack.c.l.b16 %v158
        %v279 = vunpack.c.h.b16 %v158
        %v280 = vunpack.c.l.b16 %v159
        %v281 = vunpack.c.h.b16 %v159
        %v282 = vunpack.c.l.b16 %v160
        %v283 = vunpack.c.h.b16 %v160
        %v284 = vunpack.c.l.b16 %v161
        %v285 = vunpack.c.h.b16 %v161
        %v286 = vunpack.c.l.b16 %v162
        %v287 = vunpack.c.h.b16 %v162
        %v288 = vunpack.c.l.b16 %v163
        %v289 = vunpack.c.h.b16 %v163
        %v290 = vunpack.c.l.b16 %v164
        %v291 = vunpack.c.h.b16 %v164
        %v292 = vunpack.c.l.b16 %v165
        %v293 = vunpack.c.h.b16 %v165
        %v294 = vunpack.c.l.b16 %v166
        %v295 = vunpack.c.h.b16 %v166
        %v296 = vunpack.c.l.b16 %v167
        %v297 = vunpack.c.h.b16 %v167
        %v298 = vunpack.c.l.b16 %v168
        %v299 = vunpack.c.h.b16 %v168
        %v300 = vunpack.c.l.b16 %v169
        %v301 = vunpack.c.h.b16 %v169
        %v302 = vunpack.c.l.b16 %v170
        %v303 = vunpack.c.h.b16 %v170
        %v304 = vunpack.c.l.b16 %v171
        %v305 = vunpack.c.h.b16 %v171
        %v306 = vunpack.c.l.b16 %v172
        %v307 = vunpack.c.h.b16 %v172
        %v308 = vunpack.c.l.b16 %v173
        %v309 = vunpack.c.h.b16 %v173
        %v310 = vunpack.c.l.b16 %v174
        %v311 = vunpack.c.h.b16 %v174
        %v312 = vunpack.c.l.b16 %v175
        %v313 = vunpack.c.h.b16 %v175
        %v314 = vunpack.c.l.b16 %v176
        %v315 = vunpack.c.h.b16 %v176
        %v316 = vunpack.c.l.b16 %v177
        %v317 = vunpack.c.h.b16 %v177
        %v318 = vunpack.c.l.b16 %v178
        %v319 = vunpack.c.h.b16 %v178
        %v320 = vunpack.c.l.b16 %v179
        %v321 = vunpack.c.h.b16 %v179
        %v322 = vunpack.c.l.b16 %v180
        %v323 = vunpack.c.h.b16 %v180
        %v324 = vunpack.c.l.b16 %v181
        %v325 = vunpack.c.h.b16 %v181
        %v326 = vunpack.c.l.b16 %v182
        %v327 = vunpack.c.h.b16 %v182
        %v328 = vunpack.c.l.b16 %v183
        %v329 = vunpack.c.h.b16 %v183
        %v330 = vunpack.c.l.b16 %v184
        %v331 = vunpack.c.h.b16 %v184
        %v332 = vunpack.c.l.b16 %v185
        %v333 = vunpack.c.h.b16 %v185
        %v334 = vunpack.c.l.b16 %v186
        %v335 = vunpack.c.h.b16 %v186
        %v336 = vunpack.c.l.b16 %v187
        %v337 = vunpack.c.h.b16 %v187
        %v338 = vunpack.c.l.b16 %v188
        %v339 = vunpack.c.h.b16 %v188
        %v340 = vunpack.c.l.b16 %v189
        %v341 = vunpack.c.h.b16 %v189
        %v342 = vunpack.c.l.b16 %v190
        %v343 = vunpack.c.h.b16 %v190
        %v344 = vunpack.c.l.b16 %v191
        %v345 = vunpack.c.h.b16 %v191
        %v346 = vunpack.c.l.b16 %v192
        %v347 = vunpack.c.h.b16 %v192
        %v348 = vpack.c.b16 %v254, %v252
        %v349 = vpack.c.b16 %v255, %v253
        %v350 = vpack.c.b16 %v258, %v256
        %v351 = vpack.c.b16 %v259, %v257
        %v352 = vpack.c.b16 %v262, %v260
        %v353 = vpack.c.b16 %v263, %v261
        %v354 = vpack.c.b16 %v266, %v264
        %v355 = vpack.c.b16 %v267, %v265
        %v356 = vpack.c.b16 %v270, %v268
        %v357 = vpack.c.b16 %v271, %v269
        %v358 = vpack.c.b16 %v274, %v272
        %v359 = vpack.c.b16 %v275, %v273
        %v360 = vpack.c.b16 %v278, %v276
        %v361 = vpack.c.b16 %v279, %v277
        %v362 = vpack.c.b16 %v282, %v280
        %v363 = vpack.c.b16 %v283, %v281
        %v364 = vpack.c.b16 %v286, %v284
        %v365 = vpack.c.b16 %v287, %v285
        %v366 = vpack.c.b16 %v290, %v288
        %v367 = vpack.c.b16 %v291, %v289
        %v368 = vpack.c.b16 %v294, %v292
        %v369 = vpack.c.b16 %v295, %v293
        %v370 = vpack.c.b16 %v298, %v296
        %v371 = vpack.c.b16 %v299, %v297
        %v372 = vpack.c.b16 %v302, %v300
        %v373 = vpack.c.b16 %v303, %v301
        %v374 = vpack.c.b16 %v306, %v304
        %v375 = vpack.c.b16 %v307, %v305
        %v376 = vpack.c.b16 %v310, %v308
        %v377 = vpack.c.b16 %v311, %v309
        %v378 = vpack.c.b16 %v314, %v312
        %v379 = vpack.c.b16 %v315, %v313
        %v380 = vpack.c.b16 %v318, %v316
        %v381 = vpack.c.b16 %v319, %v317
        %v382 = vpack.c.b16 %v322, %v320
        %v383 = vpack.c.b16 %v323, %v321
        %v384 = vpack.c.b16 %v326, %v324
        %v385 = vpack.c.b16 %v327, %v325
        %v386 = vpack.c.b16 %v330, %v328
        %v387 = vpack.c.b16 %v331, %v329
        %v388 = vpack.c.b16 %v334, %v332
        %v389 = vpack.c.b16 %v335, %v333
        %v390 = vpack.c.b16 %v338, %v336
        %v391 = vpack.c.b16 %v339, %v337
        %v392 = vpack.c.b16 %v342, %v340
        %v393 = vpack.c.b16 %v343, %v341
        %v394 = vpack.c.b16 %v346, %v344
        %v395 = vpack.c.b16 %v347, %v345
        %444 = vmatprep.subr.bf16.mxu0 %v363
        %445 = vmatpush1.bf16.msra.mxu0 %v362
        %446 = vmatprep.subr.bf16.mxu0 %v361
        %447 = vmatpush1.bf16.msra.mxu0 %v360
        %448 = vmatprep.subr.bf16.mxu0 %v359
        %449 = vmatpush1.bf16.msra.mxu0 %v358
        %450 = vmatprep.subr.bf16.mxu0 %v357
        %451 = vmatpush1.bf16.msra.mxu0 %v356
        %452 = vmatprep.subr.bf16.mxu0 %v355
        %453 = vmatpush1.bf16.msra.mxu0 %v354
        %454 = vmatprep.subr.bf16.mxu0 %v353
        %455 = vmatpush1.bf16.msra.mxu0 %v352
        %456 = vmatprep.subr.bf16.mxu0 %v351
        %457 = vmatpush1.bf16.msra.mxu0 %v350
        %458 = vmatprep.subr.bf16.mxu0 %v349
        %459 = vmatpush1.bf16.msra.mxu0 %v348
        %460 = vmatprep.subr.bf16.mxu0 %v379
        %461 = vmatpush2.bf16.msra.mxu0 %v378
        %462 = vmatprep.subr.bf16.mxu0 %v377
        %463 = vmatpush2.bf16.msra.mxu0 %v376
        %464 = vmatprep.subr.bf16.mxu0 %v375
        %465 = vmatpush2.bf16.msra.mxu0 %v374
        %466 = vmatprep.subr.bf16.mxu0 %v373
        %467 = vmatpush2.bf16.msra.mxu0 %v372
        %468 = vmatprep.subr.bf16.mxu0 %v371
        %469 = vmatpush2.bf16.msra.mxu0 %v370
        %470 = vmatprep.subr.bf16.mxu0 %v369
        %471 = vmatpush2.bf16.msra.mxu0 %v368
        %472 = vmatprep.subr.bf16.mxu0 %v367
        %473 = vmatpush2.bf16.msra.mxu0 %v366
        %474 = vmatprep.subr.bf16.mxu0 %v365
        %475 = vmatpush2.bf16.msra.mxu0 %v364
        %476 = vmatprep.mubr.bf16.mxu0 %v199
        %477 = vmatmul.mubr.bf16.gmra.mxu0 %v198
        %v478 = vpop.f32.mrf.mxu0
        %v479 = vadd.f32 0.0, %v478
        %v480 = vpop.f32.mrf.mxu0
        %v481 = vadd.f32 0.0, %v480
        %v482 = vpop.f32.mrf.mxu0
        %v483 = vpop.f32.mrf.mxu0
        %484 = vdwg.mxu0
        %485 = vmatprep.subr.bf16.mxu0 %v395
        %486 = vmatpush1.bf16.msra.mxu0 %v394
        %487 = vmatprep.subr.bf16.mxu0 %v393
        %488 = vmatpush1.bf16.msra.mxu0 %v392
        %489 = vmatprep.subr.bf16.mxu0 %v391
        %490 = vmatpush1.bf16.msra.mxu0 %v390
        %491 = vmatprep.subr.bf16.mxu0 %v389
        %492 = vmatpush1.bf16.msra.mxu0 %v388
        %493 = vmatprep.subr.bf16.mxu0 %v387
        %494 = vmatpush1.bf16.msra.mxu0 %v386
        %495 = vmatprep.subr.bf16.mxu0 %v385
        %496 = vmatpush1.bf16.msra.mxu0 %v384
        %497 = vmatprep.subr.bf16.mxu0 %v383
        %498 = vmatpush1.bf16.msra.mxu0 %v382
        %499 = vmatprep.subr.bf16.mxu0 %v381
        %500 = vmatpush1.bf16.msra.mxu0 %v380
        %501 = vmatprep.subr.bf16.mxu0 0
        %502 = vmatpush2.bf16.msra.mxu0 0
        %503 = vmatprep.subr.bf16.mxu0 0
        %504 = vmatpush2.bf16.msra.mxu0 0
        %505 = vmatprep.subr.bf16.mxu0 0
        %506 = vmatpush2.bf16.msra.mxu0 0
        %507 = vmatprep.subr.bf16.mxu0 0
        %508 = vmatpush2.bf16.msra.mxu0 0
        %509 = vmatprep.subr.bf16.mxu0 0
        %510 = vmatpush2.bf16.msra.mxu0 0
        %511 = vmatprep.subr.bf16.mxu0 0
        %512 = vmatpush2.bf16.msra.mxu0 0
        %513 = vmatprep.subr.bf16.mxu0 0
        %514 = vmatpush2.bf16.msra.mxu0 0
        %515 = vmatprep.subr.bf16.mxu0 0
        %516 = vmatpush2.bf16.msra.mxu0 0
        %517 = vmatprep.mubr.bf16.mxu0 0
        %518 = vmatmul.mubr.bf16.gmra.mxu0 %v200
        %v519 = vpop.f32.mrf.mxu0
        %v520 = vadd.f32 %v479, %v519
        %v521 = vpop.f32.mrf.mxu0
        %v522 = vadd.f32 %v481, %v521
        %v523 = vpop.f32.mrf.mxu0
        %v524 = vpop.f32.mrf.mxu0
        %525 = vdwg.mxu0
        %v526 = vpack.c.bf16 %v520, %v520
        %vm527 = vcmask 519168
        %528 = vst.msk [vmem:[#allocation2] sm:$0xf] %vm527, %v526
        %v530 = vunpack.c.l.b16 %v526
        %v531 = vpack.c.b16 %v530, %v530
        %532 = vrot.lane.b32.xlu0 %v531, 64
        %v533 = vpop.permute.xlu0 %532
        %535 = vst.msk [vmem:[#allocation3] sm:$0xf] %vm527, %v533
        %v536 = vpack.c.bf16 %v522, %v522
        %537 = vst.msk [vmem:[#allocation4] sm:$0xf] %vm527, %v536
        %v538 = vlaneseq
        %v539 = vshrl.u32 %v538, 7
        %v540 = vlaneseq
        %v541 = vand.u32 %v540, 127
        %vm542 = vcmp.le.s32.totalorder %v541, %v539
        %v543 = vld [vmem:[#allocation3] sm:$0xf]
        %v544 = vld [vmem:[#allocation2] sm:$0xf]
        %v545 = vld [vmem:[#allocation4] sm:$0xf]
        %vm546 = vcmask 523264
        %v548 = vsel %vm546, %v543, 0
        %v551 = vsel %vm546, %v544, 0
        %553 = vmatprep.subr.bf16.mxu0 0
        %554 = vmatpush1.bf16.xpose.msra.mxu0 0
        %555 = vmatprep.subr.bf16.mxu0 0
        %556 = vmatpush1.bf16.xpose.msra.mxu0 0
        %557 = vmatprep.subr.bf16.mxu0 0
        %558 = vmatpush1.bf16.xpose.msra.mxu0 0
        %559 = vmatprep.subr.bf16.mxu0 0
        %560 = vmatpush1.bf16.xpose.msra.mxu0 0
        %561 = vmatprep.subr.bf16.mxu0 0
        %562 = vmatpush1.bf16.xpose.msra.mxu0 0
        %563 = vmatprep.subr.bf16.mxu0 0
        %564 = vmatpush1.bf16.xpose.msra.mxu0 0
        %565 = vmatprep.subr.bf16.mxu0 0
        %566 = vmatpush1.bf16.xpose.msra.mxu0 0
        %567 = vmatprep.subr.bf16.mxu0 0
        %568 = vmatpush1.bf16.xpose.msra.mxu0 %v551
        %569 = vmatprep.subr.bf16.mxu0 0
        %570 = vmatpush2.bf16.xpose.msra.mxu0 0
        %571 = vmatprep.subr.bf16.mxu0 0
        %572 = vmatpush2.bf16.xpose.msra.mxu0 0
        %573 = vmatprep.subr.bf16.mxu0 0
        %574 = vmatpush2.bf16.xpose.msra.mxu0 0
        %575 = vmatprep.subr.bf16.mxu0 0
        %576 = vmatpush2.bf16.xpose.msra.mxu0 0
        %577 = vmatprep.subr.bf16.mxu0 0
        %578 = vmatpush2.bf16.xpose.msra.mxu0 0
        %579 = vmatprep.subr.bf16.mxu0 0
        %580 = vmatpush2.bf16.xpose.msra.mxu0 0
        %581 = vmatprep.subr.bf16.mxu0 0
        %582 = vmatpush2.bf16.xpose.msra.mxu0 0
        %583 = vmatprep.subr.bf16.mxu0 0
        %584 = vmatpush2.bf16.xpose.msra.mxu0 0
        %585 = vmatprep.mubr.bf16.mxu0 0
        %586 = vmatmul.mubr.bf16.gmra.mxu0 %v548
        %v587 = vpop.f32.mrf.mxu0
        %v588 = vadd.f32 0.0, %v587
        %v589 = vpop.f32.mrf.mxu0
        %v590 = vpop.f32.mrf.mxu0
        %v591 = vpop.f32.mrf.mxu0
        %592 = vdwg.mxu0
        %v593 = vsel %vm542, %v588, -inf
        %vm594 = vcmask 64512
        %v595 = vsel %vm594, %v593, -inf
        %596 = vmax.xlane.f32.xlu0 %v595
        %v597 = vpop.xlane.xlu0 %596
        %v598 = vsub.f32 %v593, %v597
        %v599 = vmul.f32 %v598, 1.442695
        %v600 = vpow.pop %v599
        %v601 = vsel %vm594, %v600, 0.0
        %602 = vadd.xlane.f32.xlu0 %v601
        %v603 = vpop.xlane.xlu0 %602
        %v604 = vrcp.pop %v603
        %v605 = vmul.f32 %v600, %v604
        %v606 = vpack.c.bf16 %v605, %v605
        %v608 = vsel %vm594, %v606, 0
        %vm610 = vcmask 1043456
        %v612 = vsel %vm610, %v545, 0
        %614 = vmatprep.subr.bf16.mxu0 0
        %615 = vmatpush1.bf16.msra.mxu0 0
        %616 = vmatprep.subr.bf16.mxu0 0
        %617 = vmatpush1.bf16.msra.mxu0 0
        %618 = vmatprep.subr.bf16.mxu0 0
        %619 = vmatpush1.bf16.msra.mxu0 0
        %620 = vmatprep.subr.bf16.mxu0 0
        %621 = vmatpush1.bf16.msra.mxu0 0
        %622 = vmatprep.subr.bf16.mxu0 0
        %623 = vmatpush1.bf16.msra.mxu0 0
        %624 = vmatprep.subr.bf16.mxu0 0
        %625 = vmatpush1.bf16.msra.mxu0 0
        %626 = vmatprep.subr.bf16.mxu0 0
        %627 = vmatpush1.bf16.msra.mxu0 0
        %628 = vmatprep.subr.bf16.mxu0 0
        %629 = vmatpush1.bf16.msra.mxu0 %v612
        %630 = vmatprep.subr.bf16.mxu0 0
        %631 = vmatpush2.bf16.msra.mxu0 0
        %632 = vmatprep.subr.bf16.mxu0 0
        %633 = vmatpush2.bf16.msra.mxu0 0
        %634 = vmatprep.subr.bf16.mxu0 0
        %635 = vmatpush2.bf16.msra.mxu0 0
        %636 = vmatprep.subr.bf16.mxu0 0
        %637 = vmatpush2.bf16.msra.mxu0 0
        %638 = vmatprep.subr.bf16.mxu0 0
        %639 = vmatpush2.bf16.msra.mxu0 0
        %640 = vmatprep.subr.bf16.mxu0 0
        %641 = vmatpush2.bf16.msra.mxu0 0
        %642 = vmatprep.subr.bf16.mxu0 0
        %643 = vmatpush2.bf16.msra.mxu0 0
        %644 = vmatprep.subr.bf16.mxu0 0
        %645 = vmatpush2.bf16.msra.mxu0 0
        %646 = vmatprep.mubr.bf16.mxu0 0
        %647 = vmatmul.mubr.bf16.gmra.mxu0 %v608
        %v648 = vpop.f32.mrf.mxu0
        %v649 = vadd.f32 0.0, %v648
        %v650 = vpop.f32.mrf.mxu0
        %v651 = vpop.f32.mrf.mxu0
        %v652 = vpop.f32.mrf.mxu0
        %653 = vdwg.mxu0
        %654 = vst.msk [vmem:[%s136] sm:$0xff] %vm546, %v649
        %s655 = sand.u32 %s71, 1
        %s656 = scalar_lea.sflag [#allocation6], %s655
        %s657 = sand.u32 %s71, 1
        %s658 = smul.addr %s657, 8
        %s659 = scalar_lea.vmem [#allocation5], %s658
        // Predicated region
        $region29: #{tpu_custom_call.1} parent=27 // pred_check
          %p660 = pneg %p81
        $region30: #{tpu_custom_call.1} parent=27 // pred_check_branch
          %662 = sbr.rel (%p660) target = $region32
        $region31: #{tpu_custom_call.1} parent=27 // pred_region
          %s664 = ssub.s32 128, 128
          %665 = vsyncadd %s656, %s664
          %s666 = smul.addr %s16, 128
          %s667 = scalar_lea.hbm %s2, %s666
          %s669 = sshll.u32 %s659, 4
          %s670 = int_to_ptr.vmem [resolvable:$true] %s669
          %672 = dma.vmem_to_hbm [thread:$0]  %s670, 128, %s667, %s656
        $region32: #{tpu_custom_call.1} parent=27 // pred_fallthru
          _
      $region28: #{tpu_custom_call.1} parent=5 // pred_fallthru
        _
      %p673 = scmp.le.s32.totalorder 2, %s11
      // Predicated region
      $region33: #{tpu_custom_call.1} parent=5 // pred_check
        %p674 = pneg %p673
      $region34: #{tpu_custom_call.1} parent=5 // pred_check_branch
        %676 = sbr.rel (%p674) target = $region36
      $region35: #{tpu_custom_call.1} parent=5 // pred_region
        %s677 = ssub.s32 %s11, 2
        // Predicated region
        $region37: #{tpu_custom_call.1} parent=35 // pred_check
          %p678 = pneg %p87
        $region38: #{tpu_custom_call.1} parent=35 // pred_check_branch
          %680 = sbr.rel (%p678) target = $region40
        $region39: #{tpu_custom_call.1} parent=35 // pred_region
          %s681 = sand.u32 %s72, 1
          %s682 = scalar_lea.sflag [#allocation6], %s681
          %s683 = sand.u32 %s72, 1
          %s684 = smul.addr %s683, 8
          %s685 = scalar_lea.vmem [#allocation5], %s684
          %686 = dma.done %s682, 128
        $region40: #{tpu_custom_call.1} parent=35 // pred_fallthru
          _
      $region36: #{tpu_custom_call.1} parent=5 // pred_fallthru
        _
    $region6: #{tpu_custom_call.1} parent=1 // loop_footer
      %s15 = sadd.s32 1, %s11
    $region7: #{tpu_custom_call.1} parent=1 // loop_footer_branch
      %10 = sbr.rel target = $region3
    $region8: #{tpu_custom_call.1} parent=1 // loop_exit
      _
    %687 = vsyncpa [#allocation6], 1
    %s688 = scalar_lea.sflag [#allocation6], 1
    %689 = vsyncpa %s688, 1

</llo_original>
